<compile_context>
chip_gen: v7x
topology: tpu7x:2x2x1
jax: 0.10.0
libtpu: 0.0.40
codegen_flags: <defaults>
</compile_context>

<pallas_src>
import functools

import jax
import jax.numpy as jnp
from jax import lax
from jax.experimental import pallas as pl
from jax.experimental.pallas import tpu as pltpu

_PAD = 2  # halo radius: max(theta0 // 2, theta // 2) for theta0=3, theta=5


def _maxpool2d_same(x, k, hpad_ref, wpad_ref):
    """max_pool2d(kernel_size=k, stride=1, padding=(k-1)//2) on an (H, W) plane.

    Separable: H (sublane) pass then W (lane) pass.  Each pass stores the operand
    into the centre of a zero-halo VMEM scratch and reads k-1 statically shifted
    windows back, so no concatenate copies are materialized.  Zero fill equals the
    implicit -inf padding because all pooled values are >= 0 and the window centre
    is always in range.
    """
    h, w = x.shape
    r = (k - 1) // 2
    # --- H (sublane) pass ---
    hpad_ref[pl.ds(_PAD, h), :] = x
    acc = x
    for d in range(-r, r + 1):
        if d != 0:
            acc = jnp.maximum(acc, hpad_ref[pl.ds(_PAD + d, h), :])
    # --- W (lane) pass ---
    wpad_ref[:, pl.ds(_PAD, w)] = acc
    out = acc
    for d in range(-r, r + 1):
        if d != 0:
            out = jnp.maximum(out, wpad_ref[:, pl.ds(_PAD + d, w)])
    return out


def _boundary_kernel(pred_ref, gt_ref, out_ref, hpad_ref, wpad_ref, *, theta0, theta):
    num_ch, h, w = pred_ref.shape  # batch dim is squeezed by the BlockSpec

    # Zero the halo scratches once per grid step (halos stay zero afterwards; the
    # pooling passes only overwrite the centre).  Unconditional, so it is correct
    # when the "parallel" batch axis is split across TensorCores.
    hpad_ref[...] = jnp.zeros_like(hpad_ref)
    wpad_ref[...] = jnp.zeros_like(wpad_ref)

    # --- channel-softmax statistics, one (H, W) plane live at a time ---
    def max_body(ch, m_acc):
        return jnp.maximum(m_acc, pred_ref[ch].astype(jnp.float32))

    m = lax.fori_loop(1, num_ch, max_body, pred_ref[0].astype(jnp.float32))

    def sum_body(ch, s_acc):
        return s_acc + jnp.exp(pred_ref[ch].astype(jnp.float32) - m)

    s = lax.fori_loop(0, num_ch, sum_body, jnp.zeros((h, w), jnp.float32))
    inv_s = pl.reciprocal(s)  # exact; one EUP reciprocal instead of C divides

    # --- per-channel boundary maps, pools, reductions and BF1 ---
    def channel_body(ch, total):
        pred_c = jnp.exp(pred_ref[ch].astype(jnp.float32) - m) * inv_s
        gt_c = gt_ref[ch].astype(jnp.float32)
        inv_gt = 1.0 - gt_c
        # clamp keeps inv_pred >= 0 so the zero-fill pooling stays exact
        inv_pred = jnp.maximum(1.0 - pred_c, 0.0)

        gt_b = _maxpool2d_same(inv_gt, theta0, hpad_ref, wpad_ref) - inv_gt
        pred_b = _maxpool2d_same(inv_pred, theta0, hpad_ref, wpad_ref) - inv_pred
        gt_b_ext = _maxpool2d_same(gt_b, theta, hpad_ref, wpad_ref)
        pred_b_ext = _maxpool2d_same(pred_b, theta, hpad_ref, wpad_ref)

        sum_p_num = jnp.sum(pred_b * gt_b_ext)
        sum_p_den = jnp.sum(pred_b)
        sum_r_num = jnp.sum(pred_b_ext * gt_b)
        sum_r_den = jnp.sum(gt_b)
        P = sum_p_num / (sum_p_den + 1e-7)
        R = sum_r_num / (sum_r_den + 1e-7)
        bf1 = 2.0 * P * R / (P + R + 1e-7)
        return total + (1.0 - bf1)

    total = lax.fori_loop(0, num_ch, channel_body, jnp.zeros((1, 1), jnp.float32))
    out_ref[0] = total  # per-batch partial sum of (1 - BF1) over channels


def boundary_loss(pred_output, gt, theta0=3, theta=5):
    """BoundaryLoss.forward: pred_output (N,C,H,W) logits, gt (N,C,H,W) one-hot."""
    n, c, h, w = pred_output.shape
    assert gt.shape == (n, c, h, w), "gt must be one-hot with shape (N, C, H, W)"

    kernel = functools.partial(_boundary_kernel, theta0=int(theta0), theta=int(theta))

    # Explicit scoped-VMEM budget: two double-buffered input slabs + halo scratches +
    # a handful of live (H, W) planes, with headroom (scoped default is only 16 MiB
    # on v5e / 32 MiB on v6e & v7x).
    slab = c * h * w
    need = (2 * slab * (pred_output.dtype.itemsize + gt.dtype.itemsize)
            + ((h + 2 * _PAD) * w + h * (w + 2 * _PAD)) * 4
            + 10 * h * w * 4)
    vmem_limit = int(min(100 * 2**20, max(32 * 2**20, 2 * need)))

    partial_sums = pl.pallas_call(
        kernel,
        out_shape=jax.ShapeDtypeStruct((n, 1, 1), jnp.float32),
        grid_spec=pltpu.PrefetchScalarGridSpec(
            num_scalar_prefetch=0,
            grid=(n,),
            in_specs=[
                pl.BlockSpec((None, c, h, w), lambda b: (b, 0, 0, 0)),  # logits slab
                pl.BlockSpec((None, c, h, w), lambda b: (b, 0, 0, 0)),  # one-hot gt
            ],
            out_specs=pl.BlockSpec((1, 1, 1), lambda b: (b, 0, 0)),      # per-batch partial
            scratch_shapes=[
                pltpu.VMEM((h + 2 * _PAD, w), jnp.float32),  # H-pass zero-halo scratch
                pltpu.VMEM((h, w + 2 * _PAD), jnp.float32),  # W-pass zero-halo scratch
            ],
        ),
        compiler_params=pltpu.CompilerParams(
            dimension_semantics=("parallel",),
            vmem_limit_bytes=vmem_limit,
        ),
    )(pred_output, gt)

    # tiny cross-batch combine (N scalars) done outside the kernel
    return jnp.sum(partial_sums) / jnp.float32(n * c)


def _reference(pred_output, gt, theta0=3, theta=5):
    """Pure-JAX mirror of the PyTorch BoundaryLoss.forward."""
    pred = jax.nn.softmax(pred_output.astype(jnp.float32), axis=1)
    gt = gt.astype(jnp.float32)

    def max_pool(x, k):
        p = (k - 1) // 2
        return lax.reduce_window(
            x, -jnp.inf, lax.max,
            window_dimensions=(1, 1, k, k),
            window_strides=(1, 1, 1, 1),
            padding=((0, 0), (0, 0), (p, p), (p, p)))

    gt_b = max_pool(1.0 - gt, theta0) - (1.0 - gt)
    pred_b = max_pool(1.0 - pred, theta0) - (1.0 - pred)
    gt_b_ext = max_pool(gt_b, theta)
    pred_b_ext = max_pool(pred_b, theta)

    n, c = pred.shape[:2]
    gt_b = gt_b.reshape(n, c, -1)
    pred_b = pred_b.reshape(n, c, -1)
    gt_b_ext = gt_b_ext.reshape(n, c, -1)
    pred_b_ext = pred_b_ext.reshape(n, c, -1)

    P = jnp.sum(pred_b * gt_b_ext, axis=2) / (jnp.sum(pred_b, axis=2) + 1e-7)
    R = jnp.sum(pred_b_ext * gt_b, axis=2) / (jnp.sum(gt_b, axis=2) + 1e-7)
    BF1 = 2.0 * P * R / (P + R + 1e-7)
    return jnp.mean(1.0 - BF1)


if __name__ == "__main__":
    key = jax.random.PRNGKey(0)
    k1, k2 = jax.random.split(key)
    N, C, H, W = 2, 4, 16, 16
    pred_output = jax.random.normal(k1, (N, C, H, W), dtype=jnp.float32)
    labels = jax.random.randint(k2, (N, H, W), 0, C)
    gt = jax.nn.one_hot(labels, C, axis=1, dtype=jnp.float32)   # (N, C, H, W) one-hot

    loss = boundary_loss(pred_output, gt)
    loss = jax.block_until_ready(loss)

    ref = _reference(pred_output, gt)
    assert jnp.allclose(loss, ref, rtol=1e-5, atol=1e-5), (loss, ref)
    print("KERNEL_OK")
</pallas_src>

<mosaic_0001>
module attributes {stable_mosaic.version = 11 : i64} {
  func.func @_boundary_kernel(%arg0: i32, %arg1: memref<1x4x16x16xf32, #tpu.memory_space<vmem>>, %arg2: memref<1x4x16x16xf32, #tpu.memory_space<vmem>>, %arg3: memref<1x1x1xf32, #tpu.memory_space<vmem>>, %arg4: memref<20x16xf32, #tpu.memory_space<vmem>>, %arg5: memref<16x20xf32, #tpu.memory_space<vmem>>) attributes {dimension_semantics = [#tpu.dimension_semantics<parallel>], iteration_bounds = array<i64: 2>, scalar_prefetch = 0 : i64, scratch_operands = 2 : i64, tpu.core_type = #tpu.core_type<tc>, window_params = [{transform_indices = @transform_0, window_bounds = array<i64: 1, 4, 16, 16>}, {transform_indices = @transform_1, window_bounds = array<i64: 1, 4, 16, 16>}, {transform_indices = @transform_2, window_bounds = array<i64: 1, 1, 1>}]} {
    %cst = arith.constant 0.000000e+00 : f32
    %0 = vector.broadcast %cst : f32 to vector<20x16xf32>
    %c0 = arith.constant 0 : index
    %c0_0 = arith.constant 0 : index
    %1 = vector.load %arg4[%c0, %c0_0] : memref<20x16xf32, #tpu.memory_space<vmem>>, vector<20x16xf32>
    tpu.vector_store %arg4[%c0, %c0_0], %0 {strides = array<i32>} : memref<20x16xf32, #tpu.memory_space<vmem>>, vector<20x16xf32>,
    %cst_1 = arith.constant 0.000000e+00 : f32
    %2 = vector.broadcast %cst_1 : f32 to vector<16x20xf32>
    %c0_2 = arith.constant 0 : index
    %c0_3 = arith.constant 0 : index
    %3 = vector.load %arg5[%c0_2, %c0_3] : memref<16x20xf32, #tpu.memory_space<vmem>>, vector<16x20xf32>
    tpu.vector_store %arg5[%c0_2, %c0_3], %2 {strides = array<i32>} : memref<16x20xf32, #tpu.memory_space<vmem>>, vector<16x20xf32>,
    %c0_4 = arith.constant 0 : index
    %c0_5 = arith.constant 0 : index
    %c0_6 = arith.constant 0 : index
    %c0_7 = arith.constant 0 : index
    %4 = vector.load %arg1[%c0_4, %c0_5, %c0_6, %c0_7] : memref<1x4x16x16xf32, #tpu.memory_space<vmem>>, vector<1x1x16x16xf32>
    %5 = vector.shape_cast %4 : vector<1x1x16x16xf32> to vector<16x16xf32>
    %c1_i32 = arith.constant 1 : i32
    %c3_i32 = arith.constant 3 : i32
    %6 = arith.addi %c1_i32, %c3_i32 : i32
    %c1_i32_8 = arith.constant 1 : i32
    %7 = scf.for %arg6 = %c1_i32 to %6 step %c1_i32_8 iter_args(%arg7 = %5) -> (vector<16x16xf32>)  : i32 {
      %c0_21 = arith.constant 0 : index
      %18 = arith.index_cast %arg6 : i32 to index
      %c0_22 = arith.constant 0 : index
      %c0_23 = arith.constant 0 : index
      %19 = vector.load %arg1[%c0_21, %18, %c0_22, %c0_23] : memref<1x4x16x16xf32, #tpu.memory_space<vmem>>, vector<1x1x16x16xf32>
      %20 = vector.shape_cast %19 : vector<1x1x16x16xf32> to vector<16x16xf32>
      %21 = arith.maximumf %arg7, %20 : vector<16x16xf32>
      scf.yield %21 : vector<16x16xf32>
    }
    %c3_i32_9 = arith.constant 3 : i32
    %cst_10 = arith.constant 0.000000e+00 : f32
    %8 = vector.broadcast %cst_10 : f32 to vector<16x16xf32>
    %c0_i32 = arith.constant 0 : i32
    %c4_i32 = arith.constant 4 : i32
    %9 = arith.addi %c0_i32, %c4_i32 : i32
    %c1_i32_11 = arith.constant 1 : i32
    %10 = scf.for %arg6 = %c0_i32 to %9 step %c1_i32_11 iter_args(%arg7 = %8) -> (vector<16x16xf32>)  : i32 {
      %c0_21 = arith.constant 0 : index
      %18 = arith.index_cast %arg6 : i32 to index
      %c0_22 = arith.constant 0 : index
      %c0_23 = arith.constant 0 : index
      %19 = vector.load %arg1[%c0_21, %18, %c0_22, %c0_23] : memref<1x4x16x16xf32, #tpu.memory_space<vmem>>, vector<1x1x16x16xf32>
      %20 = vector.shape_cast %19 : vector<1x1x16x16xf32> to vector<16x16xf32>
      %21 = arith.subf %20, %7 : vector<16x16xf32>
      %22 = math.exp %21 : vector<16x16xf32>
      %23 = arith.addf %arg7, %22 : vector<16x16xf32>
      scf.yield %23 : vector<16x16xf32>
    }
    %c4_i32_12 = arith.constant 4 : i32
    %11 = tpu.reciprocal %10 : vector<16x16xf32> -> vector<16x16xf32>
    %cst_13 = arith.constant 0.000000e+00 : f32
    %12 = vector.broadcast %cst_13 : f32 to vector<1x1xf32>
    %c0_i32_14 = arith.constant 0 : i32
    %c4_i32_15 = arith.constant 4 : i32
    %13 = arith.addi %c0_i32_14, %c4_i32_15 : i32
    %c1_i32_16 = arith.constant 1 : i32
    %14 = scf.for %arg6 = %c0_i32_14 to %13 step %c1_i32_16 iter_args(%arg7 = %12) -> (vector<1x1xf32>)  : i32 {
      %c0_21 = arith.constant 0 : index
      %18 = arith.index_cast %arg6 : i32 to index
      %c0_22 = arith.constant 0 : index
      %c0_23 = arith.constant 0 : index
      %19 = vector.load %arg1[%c0_21, %18, %c0_22, %c0_23] : memref<1x4x16x16xf32, #tpu.memory_space<vmem>>, vector<1x1x16x16xf32>
      %20 = vector.shape_cast %19 : vector<1x1x16x16xf32> to vector<16x16xf32>
      %21 = arith.subf %20, %7 : vector<16x16xf32>
      %22 = math.exp %21 : vector<16x16xf32>
      %23 = arith.mulf %22, %11 : vector<16x16xf32>
      %c0_24 = arith.constant 0 : index
      %24 = arith.index_cast %arg6 : i32 to index
      %c0_25 = arith.constant 0 : index
      %c0_26 = arith.constant 0 : index
      %25 = vector.load %arg2[%c0_24, %24, %c0_25, %c0_26] : memref<1x4x16x16xf32, #tpu.memory_space<vmem>>, vector<1x1x16x16xf32>
      %26 = vector.shape_cast %25 : vector<1x1x16x16xf32> to vector<16x16xf32>
      %cst_27 = arith.constant 1.000000e+00 : f32
      %27 = vector.broadcast %cst_27 : f32 to vector<16x16xf32>
      %28 = arith.subf %27, %26 : vector<16x16xf32>
      %cst_28 = arith.constant 1.000000e+00 : f32
      %29 = vector.broadcast %cst_28 : f32 to vector<16x16xf32>
      %30 = arith.subf %29, %23 : vector<16x16xf32>
      %cst_29 = arith.constant 0.000000e+00 : f32
      %31 = vector.broadcast %cst_29 : f32 to vector<16x16xf32>
      %32 = arith.maximumf %30, %31 : vector<16x16xf32>
      %c2 = arith.constant 2 : index
      %c0_30 = arith.constant 0 : index
      %33 = vector.load %arg4[%c2, %c0_30] : memref<20x16xf32, #tpu.memory_space<vmem>>, vector<16x16xf32>
      tpu.vector_store %arg4[%c2, %c0_30], %28 {strides = array<i32>} : memref<20x16xf32, #tpu.memory_space<vmem>>, vector<16x16xf32>,
      %c1 = arith.constant 1 : index
      %c0_31 = arith.constant 0 : index
      %34 = vector.load %arg4[%c1, %c0_31] : memref<20x16xf32, #tpu.memory_space<vmem>>, vector<16x16xf32>
      %35 = arith.maximumf %28, %34 : vector<16x16xf32>
      %c3 = arith.constant 3 : index
      %c0_32 = arith.constant 0 : index
      %36 = vector.load %arg4[%c3, %c0_32] : memref<20x16xf32, #tpu.memory_space<vmem>>, vector<16x16xf32>
      %37 = arith.maximumf %35, %36 : vector<16x16xf32>
      %c0_33 = arith.constant 0 : index
      %c2_34 = arith.constant 2 : index
      %38 = vector.load %arg5[%c0_33, %c2_34] : memref<16x20xf32, #tpu.memory_space<vmem>>, vector<16x16xf32>
      tpu.vector_store %arg5[%c0_33, %c2_34], %37 {strides = array<i32>} : memref<16x20xf32, #tpu.memory_space<vmem>>, vector<16x16xf32>,
      %c0_35 = arith.constant 0 : index
      %c1_36 = arith.constant 1 : index
      %39 = vector.load %arg5[%c0_35, %c1_36] : memref<16x20xf32, #tpu.memory_space<vmem>>, vector<16x16xf32>
      %40 = arith.maximumf %37, %39 : vector<16x16xf32>
      %c0_37 = arith.constant 0 : index
      %c3_38 = arith.constant 3 : index
      %41 = vector.load %arg5[%c0_37, %c3_38] : memref<16x20xf32, #tpu.memory_space<vmem>>, vector<16x16xf32>
      %42 = arith.maximumf %40, %41 : vector<16x16xf32>
      %43 = arith.subf %42, %28 : vector<16x16xf32>
      %c2_39 = arith.constant 2 : index
      %c0_40 = arith.constant 0 : index
      %44 = vector.load %arg4[%c2_39, %c0_40] : memref<20x16xf32, #tpu.memory_space<vmem>>, vector<16x16xf32>
      tpu.vector_store %arg4[%c2_39, %c0_40], %32 {strides = array<i32>} : memref<20x16xf32, #tpu.memory_space<vmem>>, vector<16x16xf32>,
      %c1_41 = arith.constant 1 : index
      %c0_42 = arith.constant 0 : index
      %45 = vector.load %arg4[%c1_41, %c0_42] : memref<20x16xf32, #tpu.memory_space<vmem>>, vector<16x16xf32>
      %46 = arith.maximumf %32, %45 : vector<16x16xf32>
      %c3_43 = arith.constant 3 : index
      %c0_44 = arith.constant 0 : index
      %47 = vector.load %arg4[%c3_43, %c0_44] : memref<20x16xf32, #tpu.memory_space<vmem>>, vector<16x16xf32>
      %48 = arith.maximumf %46, %47 : vector<16x16xf32>
      %c0_45 = arith.constant 0 : index
      %c2_46 = arith.constant 2 : index
      %49 = vector.load %arg5[%c0_45, %c2_46] : memref<16x20xf32, #tpu.memory_space<vmem>>, vector<16x16xf32>
      tpu.vector_store %arg5[%c0_45, %c2_46], %48 {strides = array<i32>} : memref<16x20xf32, #tpu.memory_space<vmem>>, vector<16x16xf32>,
      %c0_47 = arith.constant 0 : index
      %c1_48 = arith.constant 1 : index
      %50 = vector.load %arg5[%c0_47, %c1_48] : memref<16x20xf32, #tpu.memory_space<vmem>>, vector<16x16xf32>
      %51 = arith.maximumf %48, %50 : vector<16x16xf32>
      %c0_49 = arith.constant 0 : index
      %c3_50 = arith.constant 3 : index
      %52 = vector.load %arg5[%c0_49, %c3_50] : memref<16x20xf32, #tpu.memory_space<vmem>>, vector<16x16xf32>
      %53 = arith.maximumf %51, %52 : vector<16x16xf32>
      %54 = arith.subf %53, %32 : vector<16x16xf32>
      %c2_51 = arith.constant 2 : index
      %c0_52 = arith.constant 0 : index
      %55 = vector.load %arg4[%c2_51, %c0_52] : memref<20x16xf32, #tpu.memory_space<vmem>>, vector<16x16xf32>
      tpu.vector_store %arg4[%c2_51, %c0_52], %43 {strides = array<i32>} : memref<20x16xf32, #tpu.memory_space<vmem>>, vector<16x16xf32>,
      %c0_53 = arith.constant 0 : index
      %c0_54 = arith.constant 0 : index
      %56 = vector.load %arg4[%c0_53, %c0_54] : memref<20x16xf32, #tpu.memory_space<vmem>>, vector<16x16xf32>
      %57 = arith.maximumf %43, %56 : vector<16x16xf32>
      %c1_55 = arith.constant 1 : index
      %c0_56 = arith.constant 0 : index
      %58 = vector.load %arg4[%c1_55, %c0_56] : memref<20x16xf32, #tpu.memory_space<vmem>>, vector<16x16xf32>
      %59 = arith.maximumf %57, %58 : vector<16x16xf32>
      %c3_57 = arith.constant 3 : index
      %c0_58 = arith.constant 0 : index
      %60 = vector.load %arg4[%c3_57, %c0_58] : memref<20x16xf32, #tpu.memory_space<vmem>>, vector<16x16xf32>
      %61 = arith.maximumf %59, %60 : vector<16x16xf32>
      %c4 = arith.constant 4 : index
      %c0_59 = arith.constant 0 : index
      %62 = vector.load %arg4[%c4, %c0_59] : memref<20x16xf32, #tpu.memory_space<vmem>>, vector<16x16xf32>
      %63 = arith.maximumf %61, %62 : vector<16x16xf32>
      %c0_60 = arith.constant 0 : index
      %c2_61 = arith.constant 2 : index
      %64 = vector.load %arg5[%c0_60, %c2_61] : memref<16x20xf32, #tpu.memory_space<vmem>>, vector<16x16xf32>
      tpu.vector_store %arg5[%c0_60, %c2_61], %63 {strides = array<i32>} : memref<16x20xf32, #tpu.memory_space<vmem>>, vector<16x16xf32>,
      %c0_62 = arith.constant 0 : index
      %c0_63 = arith.constant 0 : index
      %65 = vector.load %arg5[%c0_62, %c0_63] : memref<16x20xf32, #tpu.memory_space<vmem>>, vector<16x16xf32>
      %66 = arith.maximumf %63, %65 : vector<16x16xf32>
      %c0_64 = arith.constant 0 : index
      %c1_65 = arith.constant 1 : index
      %67 = vector.load %arg5[%c0_64, %c1_65] : memref<16x20xf32, #tpu.memory_space<vmem>>, vector<16x16xf32>
      %68 = arith.maximumf %66, %67 : vector<16x16xf32>
      %c0_66 = arith.constant 0 : index
      %c3_67 = arith.constant 3 : index
      %69 = vector.load %arg5[%c0_66, %c3_67] : memref<16x20xf32, #tpu.memory_space<vmem>>, vector<16x16xf32>
      %70 = arith.maximumf %68, %69 : vector<16x16xf32>
      %c0_68 = arith.constant 0 : index
      %c4_69 = arith.constant 4 : index
      %71 = vector.load %arg5[%c0_68, %c4_69] : memref<16x20xf32, #tpu.memory_space<vmem>>, vector<16x16xf32>
      %72 = arith.maximumf %70, %71 : vector<16x16xf32>
      %c2_70 = arith.constant 2 : index
      %c0_71 = arith.constant 0 : index
      %73 = vector.load %arg4[%c2_70, %c0_71] : memref<20x16xf32, #tpu.memory_space<vmem>>, vector<16x16xf32>
      tpu.vector_store %arg4[%c2_70, %c0_71], %54 {strides = array<i32>} : memref<20x16xf32, #tpu.memory_space<vmem>>, vector<16x16xf32>,
      %c0_72 = arith.constant 0 : index
      %c0_73 = arith.constant 0 : index
      %74 = vector.load %arg4[%c0_72, %c0_73] : memref<20x16xf32, #tpu.memory_space<vmem>>, vector<16x16xf32>
      %75 = arith.maximumf %54, %74 : vector<16x16xf32>
      %c1_74 = arith.constant 1 : index
      %c0_75 = arith.constant 0 : index
      %76 = vector.load %arg4[%c1_74, %c0_75] : memref<20x16xf32, #tpu.memory_space<vmem>>, vector<16x16xf32>
      %77 = arith.maximumf %75, %76 : vector<16x16xf32>
      %c3_76 = arith.constant 3 : index
      %c0_77 = arith.constant 0 : index
      %78 = vector.load %arg4[%c3_76, %c0_77] : memref<20x16xf32, #tpu.memory_space<vmem>>, vector<16x16xf32>
      %79 = arith.maximumf %77, %78 : vector<16x16xf32>
      %c4_78 = arith.constant 4 : index
      %c0_79 = arith.constant 0 : index
      %80 = vector.load %arg4[%c4_78, %c0_79] : memref<20x16xf32, #tpu.memory_space<vmem>>, vector<16x16xf32>
      %81 = arith.maximumf %79, %80 : vector<16x16xf32>
      %c0_80 = arith.constant 0 : index
      %c2_81 = arith.constant 2 : index
      %82 = vector.load %arg5[%c0_80, %c2_81] : memref<16x20xf32, #tpu.memory_space<vmem>>, vector<16x16xf32>
      tpu.vector_store %arg5[%c0_80, %c2_81], %81 {strides = array<i32>} : memref<16x20xf32, #tpu.memory_space<vmem>>, vector<16x16xf32>,
      %c0_82 = arith.constant 0 : index
      %c0_83 = arith.constant 0 : index
      %83 = vector.load %arg5[%c0_82, %c0_83] : memref<16x20xf32, #tpu.memory_space<vmem>>, vector<16x16xf32>
      %84 = arith.maximumf %81, %83 : vector<16x16xf32>
      %c0_84 = arith.constant 0 : index
      %c1_85 = arith.constant 1 : index
      %85 = vector.load %arg5[%c0_84, %c1_85] : memref<16x20xf32, #tpu.memory_space<vmem>>, vector<16x16xf32>
      %86 = arith.maximumf %84, %85 : vector<16x16xf32>
      %c0_86 = arith.constant 0 : index
      %c3_87 = arith.constant 3 : index
      %87 = vector.load %arg5[%c0_86, %c3_87] : memref<16x20xf32, #tpu.memory_space<vmem>>, vector<16x16xf32>
      %88 = arith.maximumf %86, %87 : vector<16x16xf32>
      %c0_88 = arith.constant 0 : index
      %c4_89 = arith.constant 4 : index
      %89 = vector.load %arg5[%c0_88, %c4_89] : memref<16x20xf32, #tpu.memory_space<vmem>>, vector<16x16xf32>
      %90 = arith.maximumf %88, %89 : vector<16x16xf32>
      %91 = arith.mulf %54, %72 : vector<16x16xf32>
      %92 = vector.shape_cast %91 : vector<16x16xf32> to vector<1x16x16xf32>
      %cst_90 = arith.constant dense<0.000000e+00> : vector<1xf32>
      %93 = vector.multi_reduction <add>, %92, %cst_90 [1, 2] : vector<1x16x16xf32> to vector<1xf32>
      %94 = vector.shape_cast %93 : vector<1xf32> to vector<1x1x1xf32>
      %95 = vector.extract %94[0, 0, 0] : f32 from vector<1x1x1xf32>
      %96 = vector.shape_cast %54 : vector<16x16xf32> to vector<1x16x16xf32>
      %cst_91 = arith.constant dense<0.000000e+00> : vector<1xf32>
      %97 = vector.multi_reduction <add>, %96, %cst_91 [1, 2] : vector<1x16x16xf32> to vector<1xf32>
      %98 = vector.shape_cast %97 : vector<1xf32> to vector<1x1x1xf32>
      %99 = vector.extract %98[0, 0, 0] : f32 from vector<1x1x1xf32>
      %100 = arith.mulf %90, %43 : vector<16x16xf32>
      %101 = vector.shape_cast %100 : vector<16x16xf32> to vector<1x16x16xf32>
      %cst_92 = arith.constant dense<0.000000e+00> : vector<1xf32>
      %102 = vector.multi_reduction <add>, %101, %cst_92 [1, 2] : vector<1x16x16xf32> to vector<1xf32>
      %103 = vector.shape_cast %102 : vector<1xf32> to vector<1x1x1xf32>
      %104 = vector.extract %103[0, 0, 0] : f32 from vector<1x1x1xf32>
      %105 = vector.shape_cast %43 : vector<16x16xf32> to vector<1x16x16xf32>
      %cst_93 = arith.constant dense<0.000000e+00> : vector<1xf32>
      %106 = vector.multi_reduction <add>, %105, %cst_93 [1, 2] : vector<1x16x16xf32> to vector<1xf32>
      %107 = vector.shape_cast %106 : vector<1xf32> to vector<1x1x1xf32>
      %108 = vector.extract %107[0, 0, 0] : f32 from vector<1x1x1xf32>
      %cst_94 = arith.constant 1.000000e-07 : f32
      %109 = arith.addf %99, %cst_94 : f32
      %110 = arith.divf %95, %109 : f32
      %cst_95 = arith.constant 1.000000e-07 : f32
      %111 = arith.addf %108, %cst_95 : f32
      %112 = arith.divf %104, %111 : f32
      %cst_96 = arith.constant 2.000000e+00 : f32
      %113 = arith.mulf %cst_96, %110 : f32
      %114 = arith.mulf %113, %112 : f32
      %115 = arith.addf %110, %112 : f32
      %cst_97 = arith.constant 1.000000e-07 : f32
      %116 = arith.addf %115, %cst_97 : f32
      %117 = arith.divf %114, %116 : f32
      %cst_98 = arith.constant 1.000000e+00 : f32
      %118 = arith.subf %cst_98, %117 : f32
      %119 = vector.broadcast %118 : f32 to vector<1x1xf32>
      %120 = arith.addf %arg7, %119 : vector<1x1xf32>
      scf.yield %120 : vector<1x1xf32>
    }
    %c4_i32_17 = arith.constant 4 : i32
    %c0_18 = arith.constant 0 : index
    %c0_19 = arith.constant 0 : index
    %c0_20 = arith.constant 0 : index
    %15 = vector.load %arg3[%c0_18, %c0_19, %c0_20] : memref<1x1x1xf32, #tpu.memory_space<vmem>>, vector<1x1x1xf32>
    %16 = vector.shape_cast %15 : vector<1x1x1xf32> to vector<1x1xf32>
    %17 = vector.shape_cast %14 : vector<1x1xf32> to vector<1x1x1xf32>
    tpu.vector_store %arg3[%c0_18, %c0_19, %c0_20], %17 {strides = array<i32>} : memref<1x1x1xf32, #tpu.memory_space<vmem>>, vector<1x1x1xf32>,
    return
  }
  func.func @transform_0(%arg0: i32) -> (i32, i32, i32, i32) {
    %c0_i32 = arith.constant 0 : i32
    %c0_i32_0 = arith.constant 0 : i32
    %c0_i32_1 = arith.constant 0 : i32
    %c0_i32_2 = arith.constant 0 : i32
    return %arg0, %c0_i32, %c0_i32_0, %c0_i32_1 : i32, i32, i32, i32
  }
  func.func @transform_1(%arg0: i32) -> (i32, i32, i32, i32) {
    %c0_i32 = arith.constant 0 : i32
    %c0_i32_0 = arith.constant 0 : i32
    %c0_i32_1 = arith.constant 0 : i32
    %c0_i32_2 = arith.constant 0 : i32
    return %arg0, %c0_i32, %c0_i32_0, %c0_i32_1 : i32, i32, i32, i32
  }
  func.func @transform_2(%arg0: i32) -> (i32, i32, i32) {
    %c0_i32 = arith.constant 0 : i32
    %c0_i32_0 = arith.constant 0 : i32
    %c0_i32_1 = arith.constant 0 : i32
    return %arg0, %c0_i32, %c0_i32_0 : i32, i32, i32
  }
}

</mosaic_0001>

<llo_original>
// kernel: tpu_custom_call.1
$region0: #{tpu_custom_call.1}
  #allocation0 [shape = 'u32[]', space=smem, size = 0x4, offset = 0x4, fixed_abs, tag = 'smem constant byte address 0x4 - core index']
  #allocation1 [shape = 'u32[144,128]{1,0:T(1,128)}', space=vmem, size = 0x12000, scoped, tag = 'internal scratch']
  #allocation2 [shape = 'f32[20,16]{1,0:T(8,128)}', space=vmem, size = 0x3000, scoped, tag = 'scratch operand']
  #allocation3 [shape = 'f32[16,20]{1,0:T(8,128)}', space=vmem, size = 0x2000, scoped, tag = 'scratch operand']
  %s0 = inlined_call_operand.hbm [shape: f32[2,4,16,16], index: 0, kind: input, shape index: {}]
  %s1 = inlined_call_operand.hbm [shape: f32[2,4,16,16], index: 1, kind: input, shape index: {}]
  %s2 = inlined_call_operand.vmem [shape: f32[2,1,1], index: 2, kind: output, shape index: {}]
  %s3 = sld [smem:[#allocation0]]
  $region70: #{tpu_custom_call.1} parent=0
    _
  %s5 = ssub.s32 1, %s3
  %s6 = scalar_select 0, %s5, %s3
  $region1: #{tpu_custom_call.1} parent=0
    #allocation4 [shape = 'u8[65536]{0}', space=vmem, size = 0x10000, scoped, tag = 'input window, operand 0']
    #allocation5 [shape = 's32[2]{0}', space=sflag, size = 0x8, scoped, tag = 'scoped memory for tpu_custom_call.1']
    #allocation6 [shape = 'u8[65536]{0}', space=vmem, size = 0x10000, scoped, tag = 'input window, operand 1']
    #allocation7 [shape = 's32[2]{0}', space=sflag, size = 0x8, scoped, tag = 'scoped memory for tpu_custom_call.1']
    %7 = vsyncpa [#allocation5], 0
    %s8 = scalar_lea.sflag [#allocation5], 1
    %9 = vsyncpa %s8, 0
    %10 = vsyncpa [#allocation7], 0
    %s11 = scalar_lea.sflag [#allocation7], 1
    %12 = vsyncpa %s11, 0
    loop: start=0, step=1, limit=4
    $region2: #{tpu_custom_call.1} parent=1 // loop_pre_header
      _
    $region3: #{tpu_custom_call.1} parent=1 // loop_header
      %s14 = sphi 0, %s18
      %p15 = scmp.ge.s32.totalorder %s14, 4
      %s24 = sphi 0, %s26
      %s27 = sphi 0, %s24
      %s28 = sphi 0, %s27
      %s44 = sphi 0, %s28
      %s50 = sphi 0, %s52
      %s53 = sphi 0, %s50
      %s54 = sphi 0, %s53
      %s70 = sphi 0, %s54
      %s76 = sphi 0, %s78
      %s79 = sphi 0, %s76
      %s80 = sphi 0, %s79
      %s96 = sphi 0, %s80
    $region4: #{tpu_custom_call.1} parent=1 // loop_header_branch
      %17 = sbr.rel (%p15) target = $region8
    $region5: #{tpu_custom_call.1} parent=1 // loop_body
      %s19 = ssub.s32 %s14, 1
      %s20 = ssub.s32 %s14, 2
      %s21 = sadd.s32 %s14, 1
      %s22 = ssub.s32 %s14, %s21
      %p23 = scmp.eq.s32.totalorder %s22, 0
      %s25 = sadd.s32 %s24, 1
      %s26 = scalar_select %p23, %s24, %s25
      %p29 = pneg %p23
      %p30 = scmp.eq.s32.totalorder %s14, 1
      %p31 = por %p29, %p30
      %p32 = scmp.ne.s32.totalorder %s24, %s27
      %p33 = scmp.eq.s32.totalorder %s14, 0
      %p34 = por %p32, %p33
      %p35 = scmp.ne.s32.totalorder %s24, %s27
      %p36 = scmp.eq.s32.totalorder %s19, 1
      %p37 = por %p35, %p36
      %p38 = scmp.ne.s32.totalorder %s27, %s28
      %p39 = scmp.eq.s32.totalorder %s19, 0
      %p40 = por %p38, %p39
      %p41 = scmp.ne.s32.totalorder %s27, %s28
      %p42 = scmp.eq.s32.totalorder %s20, 1
      %p43 = por %p41, %p42
      %p45 = scmp.ne.s32.totalorder %s28, %s44
      %p46 = scmp.eq.s32.totalorder %s20, 0
      %p47 = por %p45, %p46
      %s48 = ssub.s32 %s14, %s21
      %p49 = scmp.eq.s32.totalorder %s48, 0
      %s51 = sadd.s32 %s50, 1
      %s52 = scalar_select %p49, %s50, %s51
      %p55 = pneg %p49
      %p56 = scmp.eq.s32.totalorder %s14, 1
      %p57 = por %p55, %p56
      %p58 = scmp.ne.s32.totalorder %s50, %s53
      %p59 = scmp.eq.s32.totalorder %s14, 0
      %p60 = por %p58, %p59
      %p61 = scmp.ne.s32.totalorder %s50, %s53
      %p62 = scmp.eq.s32.totalorder %s19, 1
      %p63 = por %p61, %p62
      %p64 = scmp.ne.s32.totalorder %s53, %s54
      %p65 = scmp.eq.s32.totalorder %s19, 0
      %p66 = por %p64, %p65
      %p67 = scmp.ne.s32.totalorder %s53, %s54
      %p68 = scmp.eq.s32.totalorder %s20, 1
      %p69 = por %p67, %p68
      %p71 = scmp.ne.s32.totalorder %s54, %s70
      %p72 = scmp.eq.s32.totalorder %s20, 0
      %p73 = por %p71, %p72
      %s74 = ssub.s32 %s14, %s21
      %p75 = scmp.eq.s32.totalorder %s74, 0
      %s77 = sadd.s32 %s76, 1
      %s78 = scalar_select %p75, %s76, %s77
      %p81 = pneg %p75
      %p82 = scmp.eq.s32.totalorder %s14, 1
      %p83 = por %p81, %p82
      %p84 = scmp.ne.s32.totalorder %s76, %s79
      %p85 = scmp.eq.s32.totalorder %s14, 0
      %p86 = por %p84, %p85
      %p87 = scmp.ne.s32.totalorder %s76, %s79
      %p88 = scmp.eq.s32.totalorder %s19, 1
      %p89 = por %p87, %p88
      %p90 = scmp.ne.s32.totalorder %s79, %s80
      %p91 = scmp.eq.s32.totalorder %s19, 0
      %p92 = por %p90, %p91
      %p93 = scmp.ne.s32.totalorder %s79, %s80
      %p94 = scmp.eq.s32.totalorder %s20, 1
      %p95 = por %p93, %p94
      %p97 = scmp.ne.s32.totalorder %s80, %s96
      %p98 = scmp.eq.s32.totalorder %s20, 0
      %p99 = por %p97, %p98
      %p100 = scmp.le.s32.totalorder 1, %s14
      %p101 = scmp.lt.s32.totalorder %s14, 3
      %p102 = pnand %p100, %p101
      %p103 = pneg %p102
      // Predicated region
      $region9: #{tpu_custom_call.1} parent=5 // pred_check
        _
      $region10: #{tpu_custom_call.1} parent=5 // pred_check_branch
        %105 = sbr.rel (%p102) target = $region12
      $region11: #{tpu_custom_call.1} parent=5 // pred_region
        %s106 = ssub.s32 %s14, 1
      $region12: #{tpu_custom_call.1} parent=5 // pred_fallthru
        _
      %p107 = scmp.lt.s32.totalorder %s14, 2
      // Predicated region
      $region13: #{tpu_custom_call.1} parent=5 // pred_check
        %p108 = pneg %p107
      $region14: #{tpu_custom_call.1} parent=5 // pred_check_branch
        %110 = sbr.rel (%p108) target = $region16
      $region15: #{tpu_custom_call.1} parent=5 // pred_region
        // Predicated region
        $region17: #{tpu_custom_call.1} parent=15 // pred_check
          %p111 = pneg %p34
        $region18: #{tpu_custom_call.1} parent=15 // pred_check_branch
          %113 = sbr.rel (%p111) target = $region20
        $region19: #{tpu_custom_call.1} parent=15 // pred_region
          %s114 = sand.u32 %s24, 1
          %s115 = scalar_lea.sflag [#allocation5], %s114
          %s116 = sand.u32 %s24, 1
          %s117 = smul.addr %s116, 64
          %s118 = scalar_lea.vmem [#allocation4], %s117
          %s120 = ssub.s32 1024, 1024
          %121 = vsyncadd %s115, %s120
          %s122 = smul.addr %s14, 8
          %s123 = smul.addr %s122, 128
          %s124 = scalar_lea.hbm %s0, %s123
          %s125 = sshll.u32 %s118, 4
          %s126 = int_to_ptr.vmem [resolvable:$true] %s125
          %131 = dma.hbm_to_vmem [thread:$0]  %s124, 1024, %s126, %s115, 128, 128, 8
        $region20: #{tpu_custom_call.1} parent=15 // pred_fallthru
          _
        // Predicated region
        $region21: #{tpu_custom_call.1} parent=15 // pred_check
          %p132 = pneg %p60
        $region22: #{tpu_custom_call.1} parent=15 // pred_check_branch
          %134 = sbr.rel (%p132) target = $region24
        $region23: #{tpu_custom_call.1} parent=15 // pred_region
          %s135 = sand.u32 %s50, 1
          %s136 = scalar_lea.sflag [#allocation7], %s135
          %s137 = sand.u32 %s50, 1
          %s138 = smul.addr %s137, 64
          %s139 = scalar_lea.vmem [#allocation6], %s138
          %s141 = ssub.s32 1024, 1024
          %142 = vsyncadd %s136, %s141
          %s143 = smul.addr %s14, 8
          %s144 = smul.addr %s143, 128
          %s145 = scalar_lea.hbm %s1, %s144
          %s146 = sshll.u32 %s139, 4
          %s147 = int_to_ptr.vmem [resolvable:$true] %s146
          %152 = dma.hbm_to_vmem [thread:$0]  %s145, 1024, %s147, %s136, 128, 128, 8
        $region24: #{tpu_custom_call.1} parent=15 // pred_fallthru
          _
      $region16: #{tpu_custom_call.1} parent=5 // pred_fallthru
        _
      %p153 = scmp.le.s32.totalorder 1, %s14
      %p154 = scmp.lt.s32.totalorder %s14, 3
      %p155 = pnand %p153, %p154
      %p156 = pneg %p155
      // Predicated region
      $region25: #{tpu_custom_call.1} parent=5 // pred_check
        _
      $region26: #{tpu_custom_call.1} parent=5 // pred_check_branch
        %158 = sbr.rel (%p155) target = $region28
      $region27: #{tpu_custom_call.1} parent=5 // pred_region
        %s159 = ssub.s32 %s14, 1
        %s160 = sand.u32 %s27, 1
        %s161 = scalar_lea.sflag [#allocation5], %s160
        %s162 = sand.u32 %s27, 1
        %s163 = smul.addr %s162, 64
        %s164 = scalar_lea.vmem [#allocation4], %s163
        // Predicated region
        $region29: #{tpu_custom_call.1} parent=27 // pred_check
          %p165 = pneg %p40
        $region30: #{tpu_custom_call.1} parent=27 // pred_check_branch
          %167 = sbr.rel (%p165) target = $region32
        $region31: #{tpu_custom_call.1} parent=27 // pred_region
          %168 = dma.done %s161, 1024
        $region32: #{tpu_custom_call.1} parent=27 // pred_fallthru
          _
        %s169 = sand.u32 %s53, 1
        %s170 = scalar_lea.sflag [#allocation7], %s169
        %s171 = sand.u32 %s53, 1
        %s172 = smul.addr %s171, 64
        %s173 = scalar_lea.vmem [#allocation6], %s172
        // Predicated region
        $region33: #{tpu_custom_call.1} parent=27 // pred_check
          %p174 = pneg %p66
        $region34: #{tpu_custom_call.1} parent=27 // pred_check_branch
          %176 = sbr.rel (%p174) target = $region36
        $region35: #{tpu_custom_call.1} parent=27 // pred_region
          %177 = dma.done %s170, 1024
        $region36: #{tpu_custom_call.1} parent=27 // pred_fallthru
          _
        %s178 = sand.u32 %s27, 1
        %s179 = scalar_lea.sflag [#allocation5], %s178
        %s180 = sand.u32 %s27, 1
        %s181 = smul.addr %s180, 64
        %s182 = scalar_lea.vmem [#allocation4], %s181
        %p183 = pneg %p40
        %p184 = pneg %p37
        %s185 = sand.u32 %s53, 1
        %s186 = scalar_lea.sflag [#allocation7], %s185
        %s187 = sand.u32 %s53, 1
        %s188 = smul.addr %s187, 64
        %s189 = scalar_lea.vmem [#allocation6], %s188
        %p190 = pneg %p66
        %p191 = pneg %p63
        %p192 = pneg %p92
        %p193 = pneg %p89
        %p194 = scmp.lt.s32.totalorder %s19, 1
        %s195 = scalar_select %p194, %s19, 1
        %s196 = scalar_lea.vmem %s2, %s195
        %p197 = scmp.lt.s32.totalorder %s19, 1
        %s198 = scalar_select %p197, %s19, 1
        %s199 = scalar_lea.vmem %s2, %s198
        %vm200 = vcmask 130048
        %201 = vst.msk [vmem:[#allocation2] sm:$0xff] %vm200, 0.0
        %202 = vst.msk [vmem:[#allocation2 + $0x8] sm:$0xff] %vm200, 0.0
        %vm203 = vcmask 125952
        %204 = vst.msk [vmem:[#allocation2 + $0x10] sm:$0xf] %vm203, 0.0
        %vm205 = vcmask 162816
        %206 = vst.msk [vmem:[#allocation3] sm:$0xff] %vm205, 0.0
        %207 = vst.msk [vmem:[#allocation3 + $0x8] sm:$0xff] %vm205, 0.0
        %v208 = vld [vmem:[%s164] sm:$0xff]
        %v209 = vld [vmem:[%s164 + $0x8] sm:$0xff]
        loop: start=1, step=1, limit=4
        $region37: #{tpu_custom_call.1} parent=27 // loop_pre_header
          _
        $region38: #{tpu_custom_call.1} parent=27 // loop_header
          %s211 = sphi 1, %s215
          %p212 = scmp.ge.s32.totalorder %s211, 4
          %v216 = vphi %v208, %v222
          %v217 = vphi %v209, %v223
        $region39: #{tpu_custom_call.1} parent=27 // loop_header_branch
          %214 = sbr.rel (%p212) target = $region43
        $region40: #{tpu_custom_call.1} parent=27 // loop_body
          %s218 = smul.u32 %s211, 16
          %s219 = scalar_lea.vmem %s164, %s218 [#allocation4]
          %v220 = vld [vmem:[%s219] sm:$0xff]
          %v221 = vld [vmem:[%s219 + $0x8] sm:$0xff]
          %v222 = vmax.f32 %v216, %v220
          %v223 = vmax.f32 %v217, %v221
        $region41: #{tpu_custom_call.1} parent=27 // loop_footer
          %s215 = sadd.s32 1, %s211
        $region42: #{tpu_custom_call.1} parent=27 // loop_footer_branch
          %210 = sbr.rel target = $region38
        $region43: #{tpu_custom_call.1} parent=27 // loop_exit
          _
        loop: start=0, step=1, limit=4
        $region44: #{tpu_custom_call.1} parent=27 // loop_pre_header
          _
        $region45: #{tpu_custom_call.1} parent=27 // loop_header
          %s225 = sphi 0, %s229
          %p226 = scmp.ge.s32.totalorder %s225, 4
          %v230 = vphi 0.0, %v242
          %v231 = vphi 0.0, %v243
        $region46: #{tpu_custom_call.1} parent=27 // loop_header_branch
          %228 = sbr.rel (%p226) target = $region50
        $region47: #{tpu_custom_call.1} parent=27 // loop_body
          %s232 = smul.u32 %s225, 16
          %s233 = scalar_lea.vmem %s164, %s232 [#allocation4]
          %v234 = vld [vmem:[%s233] sm:$0xff]
          %v235 = vld [vmem:[%s233 + $0x8] sm:$0xff]
          %v236 = vsub.f32 %v234, %v216
          %v237 = vsub.f32 %v235, %v217
          %v238 = vmul.f32 %v236, 1.442695
          %v239 = vpow.pop %v238
          %v240 = vmul.f32 %v237, 1.442695
          %v241 = vpow.pop %v240
          %v242 = vadd.f32 %v230, %v239
          %v243 = vadd.f32 %v231, %v241
        $region48: #{tpu_custom_call.1} parent=27 // loop_footer
          %s229 = sadd.s32 1, %s225
        $region49: #{tpu_custom_call.1} parent=27 // loop_footer_branch
          %224 = sbr.rel target = $region45
        $region50: #{tpu_custom_call.1} parent=27 // loop_exit
          _
        %v244 = vrcp.pop %v230
        %v245 = vrcp.pop %v231
        loop: start=0, step=1, limit=4
        $region51: #{tpu_custom_call.1} parent=27 // loop_pre_header
          _
        $region52: #{tpu_custom_call.1} parent=27 // loop_header
          %s247 = sphi 0, %s251
          %p248 = scmp.ge.s32.totalorder %s247, 4
          %v252 = vphi 0.0, %v547
        $region53: #{tpu_custom_call.1} parent=27 // loop_header_branch
          %250 = sbr.rel (%p248) target = $region57
        $region54: #{tpu_custom_call.1} parent=27 // loop_body
          %s253 = smul.u32 %s247, 16
          %s254 = scalar_lea.vmem %s164, %s253 [#allocation4]
          %v255 = vld [vmem:[%s254] sm:$0xff]
          %v256 = vld [vmem:[%s254 + $0x8] sm:$0xff]
          %v257 = vsub.f32 %v255, %v216
          %v258 = vsub.f32 %v256, %v217
          %v259 = vmul.f32 %v257, 1.442695
          %v260 = vpow.pop %v259
          %v261 = vmul.f32 %v258, 1.442695
          %v262 = vpow.pop %v261
          %v263 = vmul.f32 %v260, %v244
          %v264 = vmul.f32 %v262, %v245
          %s265 = scalar_lea.vmem %s173, %s253 [#allocation6]
          %v266 = vld [vmem:[%s265] sm:$0xff]
          %v267 = vld [vmem:[%s265 + $0x8] sm:$0xff]
          %v268 = vsub.f32 1.0, %v266
          %v269 = vsub.f32 1.0, %v267
          %v270 = vsub.f32 1.0, %v263
          %v271 = vsub.f32 1.0, %v264
          %v272 = vmax.f32 %v270, 0.0
          %v273 = vmax.f32 %v271, 0.0
          %274 = vst.msk [vmem:[#allocation2 + $0x2] sm:$0xff] %vm200, %v268
          %275 = vst.msk [vmem:[#allocation2 + $0xa] sm:$0xff] %vm200, %v269
          %v276 = vld [vmem:[#allocation2 + $0x1] sm:$0xff]
          %v277 = vld [vmem:[#allocation2 + $0x9] sm:$0xff]
          %v278 = vmax.f32 %v268, %v276
          %v279 = vmax.f32 %v269, %v277
          %v280 = vld [vmem:[#allocation2 + $0x3] sm:$0xff]
          %v281 = vld [vmem:[#allocation2 + $0xb] sm:$0xff]
          %v282 = vmax.f32 %v278, %v280
          %v283 = vmax.f32 %v279, %v281
          %286 = vrot.lane.b32.xlu0 %v282, 2
          %v287 = vpop.permute.xlu0 %286
          %288 = vrot.lane.b32.xlu0 %v283, 2
          %v289 = vpop.permute.xlu0 %288
          %vm292 = vcmask 146448
          %293 = vst.msk [vmem:[#allocation3] sm:$0xff] %vm292, %v287
          %294 = vst.msk [vmem:[#allocation3 + $0x8] sm:$0xff] %vm292, %v289
          %v295 = vld [vmem:[#allocation3] sm:$0xff]
          %v296 = vld [vmem:[#allocation3 + $0x8] sm:$0xff]
          %299 = vrot.lane.b32.xlu0 %v295, 127
          %v300 = vpop.permute.xlu0 %299
          %301 = vrot.lane.b32.xlu0 %v296, 127
          %v302 = vpop.permute.xlu0 %301
          %v305 = vmax.f32 %v282, %v300
          %v306 = vmax.f32 %v283, %v302
          %307 = vrot.lane.b32.xlu0 %v295, 125
          %v308 = vpop.permute.xlu0 %307
          %309 = vrot.lane.b32.xlu0 %v296, 125
          %v310 = vpop.permute.xlu0 %309
          %v313 = vmax.f32 %v305, %v308
          %v314 = vmax.f32 %v306, %v310
          %v315 = vsub.f32 %v313, %v268
          %v316 = vsub.f32 %v314, %v269
          %317 = vst.msk [vmem:[#allocation2 + $0x2] sm:$0xff] %vm200, %v272
          %318 = vst.msk [vmem:[#allocation2 + $0xa] sm:$0xff] %vm200, %v273
          %v319 = vld [vmem:[#allocation2 + $0x1] sm:$0xff]
          %v320 = vld [vmem:[#allocation2 + $0x9] sm:$0xff]
          %v321 = vmax.f32 %v272, %v319
          %v322 = vmax.f32 %v273, %v320
          %v323 = vld [vmem:[#allocation2 + $0x3] sm:$0xff]
          %v324 = vld [vmem:[#allocation2 + $0xb] sm:$0xff]
          %v325 = vmax.f32 %v321, %v323
          %v326 = vmax.f32 %v322, %v324
          %329 = vrot.lane.b32.xlu0 %v325, 2
          %v330 = vpop.permute.xlu0 %329
          %331 = vrot.lane.b32.xlu0 %v326, 2
          %v332 = vpop.permute.xlu0 %331
          %335 = vst.msk [vmem:[#allocation3] sm:$0xff] %vm292, %v330
          %336 = vst.msk [vmem:[#allocation3 + $0x8] sm:$0xff] %vm292, %v332
          %v337 = vld [vmem:[#allocation3] sm:$0xff]
          %v338 = vld [vmem:[#allocation3 + $0x8] sm:$0xff]
          %341 = vrot.lane.b32.xlu0 %v337, 127
          %v342 = vpop.permute.xlu0 %341
          %343 = vrot.lane.b32.xlu0 %v338, 127
          %v344 = vpop.permute.xlu0 %343
          %v347 = vmax.f32 %v325, %v342
          %v348 = vmax.f32 %v326, %v344
          %349 = vrot.lane.b32.xlu0 %v337, 125
          %v350 = vpop.permute.xlu0 %349
          %351 = vrot.lane.b32.xlu0 %v338, 125
          %v352 = vpop.permute.xlu0 %351
          %v355 = vmax.f32 %v347, %v350
          %v356 = vmax.f32 %v348, %v352
          %v357 = vsub.f32 %v355, %v272
          %v358 = vsub.f32 %v356, %v273
          %359 = vst.msk [vmem:[#allocation2 + $0x2] sm:$0xff] %vm200, %v315
          %360 = vst.msk [vmem:[#allocation2 + $0xa] sm:$0xff] %vm200, %v316
          %v361 = vld [vmem:[#allocation2] sm:$0xff]
          %v362 = vld [vmem:[#allocation2 + $0x8] sm:$0xff]
          %v363 = vmax.f32 %v315, %v361
          %v364 = vmax.f32 %v316, %v362
          %v365 = vld [vmem:[#allocation2 + $0x1] sm:$0xff]
          %v366 = vld [vmem:[#allocation2 + $0x9] sm:$0xff]
          %v367 = vmax.f32 %v363, %v365
          %v368 = vmax.f32 %v364, %v366
          %v369 = vld [vmem:[#allocation2 + $0x3] sm:$0xff]
          %v370 = vld [vmem:[#allocation2 + $0xb] sm:$0xff]
          %v371 = vmax.f32 %v367, %v369
          %v372 = vmax.f32 %v368, %v370
          %v373 = vld [vmem:[#allocation2 + $0x4] sm:$0xff]
          %v374 = vld [vmem:[#allocation2 + $0xc] sm:$0xff]
          %v375 = vmax.f32 %v371, %v373
          %v376 = vmax.f32 %v372, %v374
          %379 = vrot.lane.b32.xlu0 %v375, 2
          %v380 = vpop.permute.xlu0 %379
          %381 = vrot.lane.b32.xlu0 %v376, 2
          %v382 = vpop.permute.xlu0 %381
          %385 = vst.msk [vmem:[#allocation3] sm:$0xff] %vm292, %v380
          %386 = vst.msk [vmem:[#allocation3 + $0x8] sm:$0xff] %vm292, %v382
          %v387 = vld [vmem:[#allocation3] sm:$0xff]
          %v388 = vld [vmem:[#allocation3 + $0x8] sm:$0xff]
          %v389 = vmax.f32 %v375, %v387
          %v390 = vmax.f32 %v376, %v388
          %393 = vrot.lane.b32.xlu0 %v387, 127
          %v394 = vpop.permute.xlu0 %393
          %395 = vrot.lane.b32.xlu0 %v388, 127
          %v396 = vpop.permute.xlu0 %395
          %v399 = vmax.f32 %v389, %v394
          %v400 = vmax.f32 %v390, %v396
          %401 = vrot.lane.b32.xlu0 %v387, 125
          %v402 = vpop.permute.xlu0 %401
          %403 = vrot.lane.b32.xlu0 %v388, 125
          %v404 = vpop.permute.xlu0 %403
          %v407 = vmax.f32 %v399, %v402
          %v408 = vmax.f32 %v400, %v404
          %409 = vrot.lane.b32.xlu0 %v387, 124
          %v410 = vpop.permute.xlu0 %409
          %411 = vrot.lane.b32.xlu0 %v388, 124
          %v412 = vpop.permute.xlu0 %411
          %v415 = vmax.f32 %v407, %v410
          %v416 = vmax.f32 %v408, %v412
          %417 = vst.msk [vmem:[#allocation2 + $0x2] sm:$0xff] %vm200, %v357
          %418 = vst.msk [vmem:[#allocation2 + $0xa] sm:$0xff] %vm200, %v358
          %v419 = vld [vmem:[#allocation2] sm:$0xff]
          %v420 = vld [vmem:[#allocation2 + $0x8] sm:$0xff]
          %v421 = vmax.f32 %v357, %v419
          %v422 = vmax.f32 %v358, %v420
          %v423 = vld [vmem:[#allocation2 + $0x1] sm:$0xff]
          %v424 = vld [vmem:[#allocation2 + $0x9] sm:$0xff]
          %v425 = vmax.f32 %v421, %v423
          %v426 = vmax.f32 %v422, %v424
          %v427 = vld [vmem:[#allocation2 + $0x3] sm:$0xff]
          %v428 = vld [vmem:[#allocation2 + $0xb] sm:$0xff]
          %v429 = vmax.f32 %v425, %v427
          %v430 = vmax.f32 %v426, %v428
          %v431 = vld [vmem:[#allocation2 + $0x4] sm:$0xff]
          %v432 = vld [vmem:[#allocation2 + $0xc] sm:$0xff]
          %v433 = vmax.f32 %v429, %v431
          %v434 = vmax.f32 %v430, %v432
          %437 = vrot.lane.b32.xlu0 %v433, 2
          %v438 = vpop.permute.xlu0 %437
          %439 = vrot.lane.b32.xlu0 %v434, 2
          %v440 = vpop.permute.xlu0 %439
          %443 = vst.msk [vmem:[#allocation3] sm:$0xff] %vm292, %v438
          %444 = vst.msk [vmem:[#allocation3 + $0x8] sm:$0xff] %vm292, %v440
          %v445 = vld [vmem:[#allocation3] sm:$0xff]
          %v446 = vld [vmem:[#allocation3 + $0x8] sm:$0xff]
          %v447 = vmax.f32 %v433, %v445
          %v448 = vmax.f32 %v434, %v446
          %451 = vrot.lane.b32.xlu0 %v445, 127
          %v452 = vpop.permute.xlu0 %451
          %453 = vrot.lane.b32.xlu0 %v446, 127
          %v454 = vpop.permute.xlu0 %453
          %v457 = vmax.f32 %v447, %v452
          %v458 = vmax.f32 %v448, %v454
          %459 = vrot.lane.b32.xlu0 %v445, 125
          %v460 = vpop.permute.xlu0 %459
          %461 = vrot.lane.b32.xlu0 %v446, 125
          %v462 = vpop.permute.xlu0 %461
          %v465 = vmax.f32 %v457, %v460
          %v466 = vmax.f32 %v458, %v462
          %467 = vrot.lane.b32.xlu0 %v445, 124
          %v468 = vpop.permute.xlu0 %467
          %469 = vrot.lane.b32.xlu0 %v446, 124
          %v470 = vpop.permute.xlu0 %469
          %v473 = vmax.f32 %v465, %v468
          %v474 = vmax.f32 %v466, %v470
          %v475 = vmul.f32 %v357, %v415
          %v476 = vmul.f32 %v358, %v416
          %v477 = vsel %vm200, %v475, 0.0
          %v478 = vsel %vm200, %v476, 0.0
          %v479 = vadd.f32 %v477, %v478
          %480 = vadd.xlane.f32.xlu0 %v479
          %v481 = vpop.xlane.xlu0 %480
          %v482 = vrot.slane %v481, 4
          %v483 = vadd.f32 %v481, %v482
          %v484 = vrot.slane %v483, 2
          %v485 = vadd.f32 %v483, %v484
          %v486 = vrot.slane %v485, 1
          %v487 = vadd.f32 %v485, %v486
          %s488 = vtos %v487
          %v489 = vsel %vm200, %v357, 0.0
          %v490 = vsel %vm200, %v358, 0.0
          %v491 = vadd.f32 %v489, %v490
          %492 = vadd.xlane.f32.xlu0 %v491
          %v493 = vpop.xlane.xlu0 %492
          %v494 = vrot.slane %v493, 4
          %v495 = vadd.f32 %v493, %v494
          %v496 = vrot.slane %v495, 2
          %v497 = vadd.f32 %v495, %v496
          %v498 = vrot.slane %v497, 1
          %v499 = vadd.f32 %v497, %v498
          %s500 = vtos %v499
          %v501 = vmul.f32 %v473, %v315
          %v502 = vmul.f32 %v474, %v316
          %v503 = vsel %vm200, %v501, 0.0
          %v504 = vsel %vm200, %v502, 0.0
          %v505 = vadd.f32 %v503, %v504
          %506 = vadd.xlane.f32.xlu0 %v505
          %v507 = vpop.xlane.xlu0 %506
          %v508 = vrot.slane %v507, 4
          %v509 = vadd.f32 %v507, %v508
          %v510 = vrot.slane %v509, 2
          %v511 = vadd.f32 %v509, %v510
          %v512 = vrot.slane %v511, 1
          %v513 = vadd.f32 %v511, %v512
          %s514 = vtos %v513
          %v515 = vsel %vm200, %v315, 0.0
          %v516 = vsel %vm200, %v316, 0.0
          %v517 = vadd.f32 %v515, %v516
          %518 = vadd.xlane.f32.xlu0 %v517
          %v519 = vpop.xlane.xlu0 %518
          %v520 = vrot.slane %v519, 4
          %v521 = vadd.f32 %v519, %v520
          %v522 = vrot.slane %v521, 2
          %v523 = vadd.f32 %v521, %v522
          %v524 = vrot.slane %v523, 1
          %v525 = vadd.f32 %v523, %v524
          %s526 = vtos %v525
          %s527 = sadd.f32 %s500, 1e-07
          %v528 = vstv %s527
          %v529 = vrcp.pop %v528
          %s530 = vtos %v529
          %s531 = smul.f32 %s488, %s530
          %s532 = sadd.f32 %s526, 1e-07
          %v533 = vstv %s532
          %v534 = vrcp.pop %v533
          %s535 = vtos %v534
          %s536 = smul.f32 %s514, %s535
          %s537 = smul.f32 %s531, 2.0
          %s538 = smul.f32 %s537, %s536
          %s539 = sadd.f32 %s531, %s536
          %s540 = sadd.f32 %s539, 1e-07
          %v541 = vstv %s540
          %v542 = vrcp.pop %v541
          %s543 = vtos %v542
          %s544 = smul.f32 %s538, %s543
          %s545 = ssub.f32 1.0, %s544
          %v546 = vstv %s545
          %v547 = vadd.f32 %v252, %v546
        $region55: #{tpu_custom_call.1} parent=27 // loop_footer
          %s251 = sadd.s32 1, %s247
        $region56: #{tpu_custom_call.1} parent=27 // loop_footer_branch
          %246 = sbr.rel target = $region52
        $region57: #{tpu_custom_call.1} parent=27 // loop_exit
          _
        %vm548 = vcmask 0
        %549 = vst.msk [vmem:[%s199] sm:$0x1] %vm548, %v252
        %p550 = scmp.lt.s32.totalorder %s19, 1
        %s551 = scalar_select %p550, %s19, 1
        %s552 = scalar_lea.vmem %s2, %s551
        // Predicated region
        $region58: #{tpu_custom_call.1} parent=27 // pred_check
          %p553 = pneg %p89
        $region59: #{tpu_custom_call.1} parent=27 // pred_check_branch
          %555 = sbr.rel (%p553) target = $region61
        $region60: #{tpu_custom_call.1} parent=27 // pred_region
          _
        $region61: #{tpu_custom_call.1} parent=27 // pred_fallthru
          _
      $region28: #{tpu_custom_call.1} parent=5 // pred_fallthru
        _
      %p556 = scmp.le.s32.totalorder 2, %s14
      // Predicated region
      $region62: #{tpu_custom_call.1} parent=5 // pred_check
        %p557 = pneg %p556
      $region63: #{tpu_custom_call.1} parent=5 // pred_check_branch
        %559 = sbr.rel (%p557) target = $region65
      $region64: #{tpu_custom_call.1} parent=5 // pred_region
        %s560 = ssub.s32 %s14, 2
        // Predicated region
        $region66: #{tpu_custom_call.1} parent=64 // pred_check
          %p561 = pneg %p95
        $region67: #{tpu_custom_call.1} parent=64 // pred_check_branch
          %563 = sbr.rel (%p561) target = $region69
        $region68: #{tpu_custom_call.1} parent=64 // pred_region
          %p564 = scmp.lt.s32.totalorder %s20, 1
          %s565 = scalar_select %p564, %s20, 1
          %s566 = scalar_lea.vmem %s2, %s565
        $region69: #{tpu_custom_call.1} parent=64 // pred_fallthru
          _
      $region65: #{tpu_custom_call.1} parent=5 // pred_fallthru
        _
    $region6: #{tpu_custom_call.1} parent=1 // loop_footer
      %s18 = sadd.s32 1, %s14
    $region7: #{tpu_custom_call.1} parent=1 // loop_footer_branch
      %13 = sbr.rel target = $region3
    $region8: #{tpu_custom_call.1} parent=1 // loop_exit
      _
    %567 = vsyncpa [#allocation5], 1
    %s568 = scalar_lea.sflag [#allocation5], 1
    %569 = vsyncpa %s568, 1
    %570 = vsyncpa [#allocation7], 1
    %s571 = scalar_lea.sflag [#allocation7], 1
    %572 = vsyncpa %s571, 1

</llo_original>
